<compile_context>
chip_gen: v6e
topology: v6e:2x2x1
jax: 0.10.0
libtpu: 0.0.40
codegen_flags: <defaults>
</compile_context>

<pallas_src>
import jax
import jax.numpy as jnp
from jax.experimental import pallas as pl
from jax.experimental.pallas import tpu as pltpu

_LANE = 128


def _round_up(x, m):
    return ((x + m - 1) // m) * m


# ----------------------------- Pallas kernel --------------------------------
def _critic_kernel(x_ref, w1t_ref, b1_ref, w2t_ref, b2_ref, w3_ref, b3_ref,
                   q_ref):
    # x   : [in_dim, TB]  (batch on lanes; contiguous TB*4-byte DMA rows)
    # w1t : [H, in_dim]   b1 : [H, 1]
    # w2t : [H, H]        b2 : [H, 1]
    # w3  : [H, 1]        b3 : [1, 1]  (SMEM scalar)
    # q   : [1, TB]       (lane-dense output store)

    # Layer 1: single MXU pass over the fused (concat'd upstream) input.
    h1 = jnp.dot(w1t_ref[...], x_ref[...], preferred_element_type=jnp.float32)
    h1 = jnp.maximum(h1 + b1_ref[...], 0.0)                     # ReLU [H, TB]

    # Layer 2.
    h2 = jnp.dot(w2t_ref[...], h1.astype(w2t_ref.dtype),
                 preferred_element_type=jnp.float32)
    h2 = jnp.maximum(h2 + b2_ref[...], 0.0)                     # ReLU [H, TB]

    # Layer 3 (scalar output per batch element): VPU broadcast-multiply plus
    # a sublane reduction instead of an N=1 MXU matmul (MXU tail for free).
    q = jnp.sum(h2 * w3_ref[...], axis=0, keepdims=True) + b3_ref[0, 0]
    q_ref[...] = q.astype(q_ref.dtype)


# ------------------------------- wrapper -------------------------------------
def critic_forward(si, so, sg, action, params, *, tb=1024,
                   compute_dtype=jnp.float32):
    """Pallas-backed Critic.forward: q = MLP(concat([si, so, sg, action]))."""
    w1, b1, w2, b2, w3, b3 = params
    B = si.shape[0]
    hidden = w2.shape[0]
    in_dim = w1.shape[0]

    # Fuse the four activation streams into ONE dense [in_dim, B] operand:
    # one DMA per grid step, batch on lanes.
    x_t = jnp.concatenate(
        [si.astype(compute_dtype), so.astype(compute_dtype),
         sg.astype(compute_dtype), action.astype(compute_dtype)], axis=-1).T

    # Transposed / column-vector parameter layouts for the batch-on-lanes form.
    w1t = w1.T.astype(compute_dtype)                       # [H, in_dim]
    w2t = w2.T.astype(compute_dtype)                       # [H, H]
    b1c = b1.reshape(1, hidden).T.astype(jnp.float32)      # [H, 1]
    b2c = b2.reshape(1, hidden).T.astype(jnp.float32)      # [H, 1]
    w3c = w3.reshape(hidden, 1).astype(compute_dtype)      # [H, 1]
    b3s = b3.reshape(1, 1).astype(jnp.float32)             # [1, 1] SMEM scalar

    # ---- batch (lane) tiling: balanced, 128-aligned, >=2 tiles for v7x -----
    n_tiles = pl.cdiv(B, tb)
    if B >= 2 * _LANE:
        n_tiles = max(n_tiles, 2)          # keep both v7x TensorCores busy
    if n_tiles == 1:
        tb_eff = B                         # single full-extent tile
    else:
        tb_eff = _round_up(pl.cdiv(B, n_tiles), _LANE)     # balanced last tile
        n_tiles = pl.cdiv(B, tb_eff)
    grid = (n_tiles,)

    def resident(shape):                   # weights stay resident in VMEM
        return pl.BlockSpec(shape, lambda i: (0, 0))

    itemsize = jnp.dtype(compute_dtype).itemsize
    flops = 2 * B * (in_dim * hidden + hidden * hidden + hidden)
    param_bytes = sum(int(p.size) * p.dtype.itemsize
                      for p in (w1t, b1c, w2t, b2c, w3c, b3s))
    cost = pl.CostEstimate(
        flops=flops,
        transcendentals=0,
        bytes_accessed=B * in_dim * itemsize + B * 4 + param_bytes,
    )

    q_t = pl.pallas_call(
        _critic_kernel,
        out_shape=jax.ShapeDtypeStruct((1, B), jnp.float32),
        grid=grid,
        in_specs=[
            pl.BlockSpec((in_dim, tb_eff), lambda i: (0, i)),   # x (batch tile)
            resident(w1t.shape),                                # W1^T
            resident(b1c.shape),                                # b1
            resident(w2t.shape),                                # W2^T
            resident(b2c.shape),                                # b2
            resident(w3c.shape),                                # w3
            pl.BlockSpec(memory_space=pltpu.MemorySpace.SMEM),  # b3 scalar
        ],
        out_specs=pl.BlockSpec((1, tb_eff), lambda i: (0, i)),  # lane-dense q
        compiler_params=pltpu.CompilerParams(
            dimension_semantics=("parallel",)),                 # megacore shard
        cost_estimate=cost,
    )(x_t, w1t, b1c, w2t, b2c, w3c, b3s)

    return q_t.T                                                # [B, 1]


# ------------------------- deterministic param init --------------------------
def _xavier_uniform(key, fan_in, fan_out):
    # matches nn.init.xavier_uniform_ (gain=1): U(-a, a), a = sqrt(6/(fi+fo)).
    # PyTorch weight is [out, in]; we store transposed [in, out] for x @ W.
    a = jnp.sqrt(6.0 / (fan_in + fan_out))
    return jax.random.uniform(key, (fan_in, fan_out), jnp.float32,
                              minval=-a, maxval=a)


def init_critic_params(key, si_dim=3, so_dim=12, sg_dim=3, action_dim=3,
                       hidden=64):
    input_dim = si_dim + so_dim + sg_dim + action_dim
    k1, k2, k3 = jax.random.split(key, 3)
    w1 = _xavier_uniform(k1, input_dim, hidden)
    b1 = jnp.zeros((1, hidden), jnp.float32)       # nn.init.constant_(bias, 0)
    w2 = _xavier_uniform(k2, hidden, hidden)
    b2 = jnp.zeros((1, hidden), jnp.float32)
    w3 = _xavier_uniform(k3, hidden, 1)
    b3 = jnp.zeros((1, 1), jnp.float32)
    return (w1, b1, w2, b2, w3, b3)


def _ref_forward(si, so, sg, action, params):
    w1, b1, w2, b2, w3, b3 = params
    x = jnp.concatenate([si, so, sg, action], axis=-1)
    h1 = jnp.maximum(x @ w1 + b1, 0.0)
    h2 = jnp.maximum(h1 @ w2 + b2, 0.0)
    return h2 @ w3 + b3


# --------------------------------- demo ---------------------------------------
if __name__ == "__main__":
    key = jax.random.PRNGKey(0)
    kp, kd = jax.random.split(key)

    si_dim, so_dim, sg_dim, action_dim = 3, 12, 3, 3
    params = init_critic_params(kp, si_dim, so_dim, sg_dim, action_dim)

    # B=8 exercises the single full-extent tile; B=384 exercises the balanced
    # 2-tile / megacore path (with a partial last tile).
    for B in (8, 384):
        ks = jax.random.split(jax.random.fold_in(kd, B), 4)
        si = jax.random.normal(ks[0], (B, si_dim), jnp.float32)
        so = jax.random.normal(ks[1], (B, so_dim), jnp.float32)
        sg = jax.random.normal(ks[2], (B, sg_dim), jnp.float32)
        action = jax.random.normal(ks[3], (B, action_dim), jnp.float32)

        q = critic_forward(si, so, sg, action, params)
        jax.block_until_ready(q)

        q_ref = _ref_forward(si, so, sg, action, params)
        assert q.shape == (B, 1)
        err = jnp.max(jnp.abs(q - q_ref))
        assert jnp.allclose(q, q_ref, atol=1e-4, rtol=1e-4), \
            f"mismatch at B={B}: max abs err {err}"

    # TODO(synk): pass compute_dtype=jnp.bfloat16 on v5e if numerics allow
    # (halves input HBM traffic; keep preferred_element_type=f32 accumulation).
    print("KERNEL_OK")
</pallas_src>

<mosaic_0001>
module attributes {stable_mosaic.version = 11 : i64} {
  func.func @_critic_kernel(%arg0: i32, %arg1: memref<21x8xf32, #tpu.memory_space<vmem>>, %arg2: memref<64x21xf32, #tpu.memory_space<vmem>>, %arg3: memref<64x1xf32, #tpu.memory_space<vmem>>, %arg4: memref<64x64xf32, #tpu.memory_space<vmem>>, %arg5: memref<64x1xf32, #tpu.memory_space<vmem>>, %arg6: memref<64x1xf32, #tpu.memory_space<vmem>>, %arg7: memref<1x1xf32, #tpu.memory_space<smem>>, %arg8: memref<1x8xf32, #tpu.memory_space<vmem>>) attributes {dimension_semantics = [#tpu.dimension_semantics<parallel>], iteration_bounds = array<i64: 1>, scalar_prefetch = 0 : i64, scratch_operands = 0 : i64, tpu.core_type = #tpu.core_type<tc>, window_params = [{transform_indices = @transform_0, window_bounds = array<i64: 21, 8>}, {pipeline_mode = #tpu.pipeline_mode<synchronous>, transform_indices = @transform_1, window_bounds = array<i64: 64, 21>}, {pipeline_mode = #tpu.pipeline_mode<synchronous>, transform_indices = @transform_2, window_bounds = array<i64: 64, 1>}, {pipeline_mode = #tpu.pipeline_mode<synchronous>, transform_indices = @transform_3, window_bounds = array<i64: 64, 64>}, {pipeline_mode = #tpu.pipeline_mode<synchronous>, transform_indices = @transform_4, window_bounds = array<i64: 64, 1>}, {pipeline_mode = #tpu.pipeline_mode<synchronous>, transform_indices = @transform_5, window_bounds = array<i64: 64, 1>}, {transform_indices = @transform_6, window_bounds = array<i64: 1, 1>}, {transform_indices = @transform_7, window_bounds = array<i64: 1, 8>}]} {
    %c0 = arith.constant 0 : index
    %c0_0 = arith.constant 0 : index
    %0 = vector.load %arg2[%c0, %c0_0] : memref<64x21xf32, #tpu.memory_space<vmem>>, vector<64x21xf32>
    %c0_1 = arith.constant 0 : index
    %c0_2 = arith.constant 0 : index
    %1 = vector.load %arg1[%c0_1, %c0_2] : memref<21x8xf32, #tpu.memory_space<vmem>>, vector<21x8xf32>
    %cst = arith.constant dense<0.000000e+00> : vector<64x8xf32>
    %2 = tpu.matmul %0, %1, %cst {dimension_numbers = #tpu.dot_dimension_numbers<[1], [0], [0], [1], [0, 0, 1, 1], [], []>} : vector<64x21xf32>, vector<21x8xf32>, vector<64x8xf32> -> vector<64x8xf32>
    %c0_3 = arith.constant 0 : index
    %c0_4 = arith.constant 0 : index
    %3 = vector.load %arg3[%c0_3, %c0_4] : memref<64x1xf32, #tpu.memory_space<vmem>>, vector<64x1xf32>
    %4 = vector.broadcast %3 : vector<64x1xf32> to vector<64x8xf32>
    %5 = arith.addf %2, %4 : vector<64x8xf32>
    %cst_5 = arith.constant 0.000000e+00 : f32
    %6 = vector.broadcast %cst_5 : f32 to vector<64x8xf32>
    %7 = arith.maximumf %5, %6 : vector<64x8xf32>
    %c0_6 = arith.constant 0 : index
    %c0_7 = arith.constant 0 : index
    %8 = vector.load %arg4[%c0_6, %c0_7] : memref<64x64xf32, #tpu.memory_space<vmem>>, vector<64x64xf32>
    %cst_8 = arith.constant dense<0.000000e+00> : vector<64x8xf32>
    %9 = tpu.matmul %8, %7, %cst_8 {dimension_numbers = #tpu.dot_dimension_numbers<[1], [0], [0], [1], [0, 0, 1, 1], [], []>} : vector<64x64xf32>, vector<64x8xf32>, vector<64x8xf32> -> vector<64x8xf32>
    %c0_9 = arith.constant 0 : index
    %c0_10 = arith.constant 0 : index
    %10 = vector.load %arg5[%c0_9, %c0_10] : memref<64x1xf32, #tpu.memory_space<vmem>>, vector<64x1xf32>
    %11 = vector.broadcast %10 : vector<64x1xf32> to vector<64x8xf32>
    %12 = arith.addf %9, %11 : vector<64x8xf32>
    %cst_11 = arith.constant 0.000000e+00 : f32
    %13 = vector.broadcast %cst_11 : f32 to vector<64x8xf32>
    %14 = arith.maximumf %12, %13 : vector<64x8xf32>
    %c0_12 = arith.constant 0 : index
    %c0_13 = arith.constant 0 : index
    %15 = vector.load %arg6[%c0_12, %c0_13] : memref<64x1xf32, #tpu.memory_space<vmem>>, vector<64x1xf32>
    %16 = vector.broadcast %15 : vector<64x1xf32> to vector<64x8xf32>
    %17 = arith.mulf %14, %16 : vector<64x8xf32>
    %cst_14 = arith.constant dense<0.000000e+00> : vector<8xf32>
    %18 = vector.multi_reduction <add>, %17, %cst_14 [0] : vector<64x8xf32> to vector<8xf32>
    %19 = vector.shape_cast %18 : vector<8xf32> to vector<1x8xf32>
    %c0_15 = arith.constant 0 : index
    %c0_16 = arith.constant 0 : index
    %20 = memref.load %arg7[%c0_15, %c0_16] : memref<1x1xf32, #tpu.memory_space<smem>>
    %21 = vector.broadcast %20 : f32 to vector<1x8xf32>
    %22 = arith.addf %19, %21 : vector<1x8xf32>
    %c0_17 = arith.constant 0 : index
    %c0_18 = arith.constant 0 : index
    %23 = vector.load %arg8[%c0_17, %c0_18] : memref<1x8xf32, #tpu.memory_space<vmem>>, vector<1x8xf32>
    tpu.vector_store %arg8[%c0_17, %c0_18], %22 {strides = array<i32>} : memref<1x8xf32, #tpu.memory_space<vmem>>, vector<1x8xf32>,
    return
  }
  func.func @transform_0(%arg0: i32) -> (i32, i32) {
    %c0_i32 = arith.constant 0 : i32
    %c0_i32_0 = arith.constant 0 : i32
    return %c0_i32, %arg0 : i32, i32
  }
  func.func @transform_1(%arg0: i32) -> (i32, i32) {
    %c0_i32 = arith.constant 0 : i32
    %c0_i32_0 = arith.constant 0 : i32
    %c0_i32_1 = arith.constant 0 : i32
    return %c0_i32, %c0_i32_0 : i32, i32
  }
  func.func @transform_2(%arg0: i32) -> (i32, i32) {
    %c0_i32 = arith.constant 0 : i32
    %c0_i32_0 = arith.constant 0 : i32
    %c0_i32_1 = arith.constant 0 : i32
    return %c0_i32, %c0_i32_0 : i32, i32
  }
  func.func @transform_3(%arg0: i32) -> (i32, i32) {
    %c0_i32 = arith.constant 0 : i32
    %c0_i32_0 = arith.constant 0 : i32
    %c0_i32_1 = arith.constant 0 : i32
    return %c0_i32, %c0_i32_0 : i32, i32
  }
  func.func @transform_4(%arg0: i32) -> (i32, i32) {
    %c0_i32 = arith.constant 0 : i32
    %c0_i32_0 = arith.constant 0 : i32
    %c0_i32_1 = arith.constant 0 : i32
    return %c0_i32, %c0_i32_0 : i32, i32
  }
  func.func @transform_5(%arg0: i32) -> (i32, i32) {
    %c0_i32 = arith.constant 0 : i32
    %c0_i32_0 = arith.constant 0 : i32
    %c0_i32_1 = arith.constant 0 : i32
    return %c0_i32, %c0_i32_0 : i32, i32
  }
  func.func @transform_6(%arg0: i32) -> (i32, i32) {
    %c0_i32 = arith.constant 0 : i32
    %c0_i32_0 = arith.constant 0 : i32
    %c0_i32_1 = arith.constant 0 : i32
    return %c0_i32, %c0_i32_0 : i32, i32
  }
  func.func @transform_7(%arg0: i32) -> (i32, i32) {
    %c0_i32 = arith.constant 0 : i32
    %c0_i32_0 = arith.constant 0 : i32
    return %c0_i32, %arg0 : i32, i32
  }
}

</mosaic_0001>

<llo_original>
// kernel: tpu_custom_call.1
$region0: #{tpu_custom_call.1}
  #allocation0 [shape = 'u32[]', space=smem, size = 0x4, offset = 0x4, fixed_abs, tag = 'smem constant byte address 0x4 - core index']
  #allocation1 [shape = 'u32[144,128]{1,0:T(1,128)}', space=vmem, size = 0x12000, scoped, tag = 'internal scratch']
  #allocation2 [shape = 'f32[1,1]{1,0:T(1,128)S(6)}', space=smem, size = 0x200, scoped, tag = 'scoped memory for tpu_custom_call.1']
  %s0 = inlined_call_operand.vmem [shape: f32[21,8], index: 0, kind: input, shape index: {}]
  %s1 = inlined_call_operand.vmem [shape: f32[64,21], index: 1, kind: input, shape index: {}]
  %s2 = inlined_call_operand.vmem [shape: f32[64,1], index: 2, kind: input, shape index: {}]
  %s3 = inlined_call_operand.vmem [shape: f32[64,64], index: 3, kind: input, shape index: {}]
  %s4 = inlined_call_operand.vmem [shape: f32[64,1], index: 4, kind: input, shape index: {}]
  %s5 = inlined_call_operand.vmem [shape: f32[64,1], index: 5, kind: input, shape index: {}]
  %s6 = inlined_call_operand.<no memory space> [shape: f32[1,1], index: 6, kind: input, shape index: {}]
  %s7 = inlined_call_operand.hbm [shape: f32[1,8], index: 7, kind: output, shape index: {}]
  %s8 = sld [smem:[#allocation0]]
  $region38: #{tpu_custom_call.1} parent=0
    _
  %s10 = ssub.s32 1, %s8
  %s11 = scalar_select 0, %s10, %s8
  %12 = sst [smem:[#allocation2]] %s6
  $region1: #{tpu_custom_call.1} parent=0
    #allocation3 [shape = 'u8[512]{0}', space=vmem, size = 0x400, scoped, tag = 'output window, operand 0, single buffered']
    #allocation4 [shape = 's32[1]{0}', space=sflag, size = 0x4, scoped, tag = 'scoped memory for tpu_custom_call.1']
    %13 = vsyncpa [#allocation4], 0
    // Predicated region
    $region2: #{tpu_custom_call.1} parent=1 // pred_check
      _
    $region3: #{tpu_custom_call.1} parent=1 // pred_check_branch
      %15 = sbr.rel (0) target = $region5
    $region4: #{tpu_custom_call.1} parent=1 // pred_region
      _
    $region5: #{tpu_custom_call.1} parent=1 // pred_fallthru
      _
    // Predicated region
    $region6: #{tpu_custom_call.1} parent=1 // pred_check
      _
    $region7: #{tpu_custom_call.1} parent=1 // pred_check_branch
      %17 = sbr.rel (0) target = $region9
    $region8: #{tpu_custom_call.1} parent=1 // pred_region
      _
    $region9: #{tpu_custom_call.1} parent=1 // pred_fallthru
      _
    // Predicated region
    $region10: #{tpu_custom_call.1} parent=1 // pred_check
      _
    $region11: #{tpu_custom_call.1} parent=1 // pred_check_branch
      %19 = sbr.rel (0) target = $region13
    $region12: #{tpu_custom_call.1} parent=1 // pred_region
      _
    $region13: #{tpu_custom_call.1} parent=1 // pred_fallthru
      _
    // Predicated region
    $region14: #{tpu_custom_call.1} parent=1 // pred_check
      _
    $region15: #{tpu_custom_call.1} parent=1 // pred_check_branch
      %21 = sbr.rel (0) target = $region17
    $region16: #{tpu_custom_call.1} parent=1 // pred_region
      _
    $region17: #{tpu_custom_call.1} parent=1 // pred_fallthru
      _
    // Predicated region
    $region18: #{tpu_custom_call.1} parent=1 // pred_check
      _
    $region19: #{tpu_custom_call.1} parent=1 // pred_check_branch
      %23 = sbr.rel (0) target = $region21
    $region20: #{tpu_custom_call.1} parent=1 // pred_region
      _
    $region21: #{tpu_custom_call.1} parent=1 // pred_fallthru
      _
    // Predicated region
    $region22: #{tpu_custom_call.1} parent=1 // pred_check
      _
    $region23: #{tpu_custom_call.1} parent=1 // pred_check_branch
      %25 = sbr.rel (0) target = $region25
    $region24: #{tpu_custom_call.1} parent=1 // pred_region
      _
    $region25: #{tpu_custom_call.1} parent=1 // pred_fallthru
      _
    // Predicated region
    $region26: #{tpu_custom_call.1} parent=1 // pred_check
      _
    $region27: #{tpu_custom_call.1} parent=1 // pred_check_branch
      %27 = sbr.rel (0) target = $region29
    $region28: #{tpu_custom_call.1} parent=1 // pred_region
      _
    $region29: #{tpu_custom_call.1} parent=1 // pred_fallthru
      _
    %v28 = vld [vmem:[%s1] sm:$0xff]
    %v29 = vld [vmem:[%s1 + $0x8] sm:$0xff]
    %v30 = vld [vmem:[%s1 + $0x10] sm:$0xff]
    %v31 = vld [vmem:[%s1 + $0x18] sm:$0xff]
    %v32 = vld [vmem:[%s1 + $0x20] sm:$0xff]
    %v33 = vld [vmem:[%s1 + $0x28] sm:$0xff]
    %v34 = vld [vmem:[%s1 + $0x30] sm:$0xff]
    %v35 = vld [vmem:[%s1 + $0x38] sm:$0xff]
    %v36 = vld [vmem:[%s0] sm:$0xff]
    %v37 = vld [vmem:[%s0 + $0x8] sm:$0xff]
    %v38 = vld [vmem:[%s0 + $0x10] sm:$0x1f]
    %v39 = vld [vmem:[%s2] sm:$0xff]
    %v40 = vld [vmem:[%s2 + $0x8] sm:$0xff]
    %v41 = vld [vmem:[%s2 + $0x10] sm:$0xff]
    %v42 = vld [vmem:[%s2 + $0x18] sm:$0xff]
    %v43 = vld [vmem:[%s2 + $0x20] sm:$0xff]
    %v44 = vld [vmem:[%s2 + $0x28] sm:$0xff]
    %v45 = vld [vmem:[%s2 + $0x30] sm:$0xff]
    %v46 = vld [vmem:[%s2 + $0x38] sm:$0xff]
    %48 = vset.pattern.permute.xlu0 0
    %49 = vperm.xlu0 %48, %v39
    %v50 = vpop.permute.xlu0 %49
    %53 = vset.pattern.permute.xlu0 0
    %54 = vperm.xlu0 %53, %v40
    %v55 = vpop.permute.xlu0 %54
    %58 = vset.pattern.permute.xlu0 0
    %59 = vperm.xlu0 %58, %v41
    %v60 = vpop.permute.xlu0 %59
    %63 = vset.pattern.permute.xlu0 0
    %64 = vperm.xlu0 %63, %v42
    %v65 = vpop.permute.xlu0 %64
    %68 = vset.pattern.permute.xlu0 0
    %69 = vperm.xlu0 %68, %v43
    %v70 = vpop.permute.xlu0 %69
    %73 = vset.pattern.permute.xlu0 0
    %74 = vperm.xlu0 %73, %v44
    %v75 = vpop.permute.xlu0 %74
    %78 = vset.pattern.permute.xlu0 0
    %79 = vperm.xlu0 %78, %v45
    %v80 = vpop.permute.xlu0 %79
    %83 = vset.pattern.permute.xlu0 0
    %84 = vperm.xlu0 %83, %v46
    %v85 = vpop.permute.xlu0 %84
    %vm87 = vcmask 171008
    %v89 = vsel %vm87, %v28, 0
    %v92 = vsel %vm87, %v29, 0
    %v95 = vsel %vm87, %v30, 0
    %v98 = vsel %vm87, %v31, 0
    %v101 = vsel %vm87, %v32, 0
    %v104 = vsel %vm87, %v33, 0
    %v107 = vsel %vm87, %v34, 0
    %v110 = vsel %vm87, %v35, 0
    %vm112 = vcmask 1044480
    %v114 = vsel %vm112, %v38, 0
    %116 = vmatprep.subr.mxu0 0.0
    %117 = vmatpush1.msra.mxu0 0.0
    %118 = vmatprep.subr.mxu0 0.0
    %119 = vmatpush1.msra.mxu0 0.0
    %120 = vmatprep.subr.mxu0 0.0
    %121 = vmatpush1.msra.mxu0 0.0
    %122 = vmatprep.subr.mxu0 0.0
    %123 = vmatpush1.msra.mxu0 0.0
    %124 = vmatprep.subr.mxu0 0.0
    %125 = vmatpush1.msra.mxu0 0.0
    %126 = vmatprep.subr.mxu0 0.0
    %127 = vmatpush1.msra.mxu0 0.0
    %128 = vmatprep.subr.mxu0 0.0
    %129 = vmatpush1.msra.mxu0 0.0
    %130 = vmatprep.subr.mxu0 0.0
    %131 = vmatpush1.msra.mxu0 0.0
    %132 = vmatprep.subr.mxu0 0.0
    %133 = vmatpush1.msra.mxu0 0.0
    %134 = vmatprep.subr.mxu0 0.0
    %135 = vmatpush1.msra.mxu0 0.0
    %136 = vmatprep.subr.mxu0 0.0
    %137 = vmatpush1.msra.mxu0 0.0
    %138 = vmatprep.subr.mxu0 0.0
    %139 = vmatpush1.msra.mxu0 0.0
    %140 = vmatprep.subr.mxu0 0.0
    %141 = vmatpush1.msra.mxu0 0.0
    %142 = vmatprep.subr.mxu0 0.0
    %143 = vmatpush1.msra.mxu0 %v114
    %144 = vmatprep.subr.mxu0 0.0
    %145 = vmatpush1.msra.mxu0 %v37
    %146 = vmatprep.subr.mxu0 0.0
    %147 = vmatpush1.msra.mxu0 %v36
    %148 = vmatprep.subr.mxu0 0.0
    %149 = vmatpush2.msra.mxu0 0.0
    %150 = vmatprep.subr.mxu0 0.0
    %151 = vmatpush2.msra.mxu0 0.0
    %152 = vmatprep.subr.mxu0 0.0
    %153 = vmatpush2.msra.mxu0 0.0
    %154 = vmatprep.subr.mxu0 0.0
    %155 = vmatpush2.msra.mxu0 0.0
    %156 = vmatprep.subr.mxu0 0.0
    %157 = vmatpush2.msra.mxu0 0.0
    %158 = vmatprep.subr.mxu0 0.0
    %159 = vmatpush2.msra.mxu0 0.0
    %160 = vmatprep.subr.mxu0 0.0
    %161 = vmatpush2.msra.mxu0 0.0
    %162 = vmatprep.subr.mxu0 0.0
    %163 = vmatpush2.msra.mxu0 0.0
    %164 = vmatprep.subr.mxu0 0.0
    %165 = vmatpush2.msra.mxu0 0.0
    %166 = vmatprep.subr.mxu0 0.0
    %167 = vmatpush2.msra.mxu0 0.0
    %168 = vmatprep.subr.mxu0 0.0
    %169 = vmatpush2.msra.mxu0 0.0
    %170 = vmatprep.subr.mxu0 0.0
    %171 = vmatpush2.msra.mxu0 0.0
    %172 = vmatprep.subr.mxu0 0.0
    %173 = vmatpush2.msra.mxu0 0.0
    %174 = vmatprep.subr.mxu0 0.0
    %175 = vmatpush2.msra.mxu0 0.0
    %176 = vmatprep.subr.mxu0 0.0
    %177 = vmatpush2.msra.mxu0 0.0
    %178 = vmatprep.subr.mxu0 0.0
    %179 = vmatpush2.msra.mxu0 0.0
    %180 = vmatprep.mubr.f32.mxu0 0.0
    %181 = vmatmul.mubr.f32.gmra.mxu0 %v89
    %v182 = vpop.f32.mrf.mxu0
    %v183 = vadd.f32 %v50, %v182
    %v184 = vpop.f32.mrf.mxu0
    %185 = vmatprep.mubr.f32.mxu0 0.0
    %186 = vmatmul.mubr.f32.gmra.mxu0 %v92
    %v187 = vpop.f32.mrf.mxu0
    %v188 = vadd.f32 %v55, %v187
    %v189 = vpop.f32.mrf.mxu0
    %190 = vmatprep.mubr.f32.mxu0 0.0
    %191 = vmatmul.mubr.f32.gmra.mxu0 %v95
    %v192 = vpop.f32.mrf.mxu0
    %v193 = vadd.f32 %v60, %v192
    %v194 = vpop.f32.mrf.mxu0
    %195 = vmatprep.mubr.f32.mxu0 0.0
    %196 = vmatmul.mubr.f32.gmra.mxu0 %v98
    %v197 = vpop.f32.mrf.mxu0
    %v198 = vadd.f32 %v65, %v197
    %v199 = vpop.f32.mrf.mxu0
    %200 = vmatprep.mubr.f32.mxu0 0.0
    %201 = vmatmul.mubr.f32.gmra.mxu0 %v101
    %v202 = vpop.f32.mrf.mxu0
    %v203 = vadd.f32 %v70, %v202
    %v204 = vpop.f32.mrf.mxu0
    %205 = vmatprep.mubr.f32.mxu0 0.0
    %206 = vmatmul.mubr.f32.gmra.mxu0 %v104
    %v207 = vpop.f32.mrf.mxu0
    %v208 = vadd.f32 %v75, %v207
    %v209 = vpop.f32.mrf.mxu0
    %210 = vmatprep.mubr.f32.mxu0 0.0
    %211 = vmatmul.mubr.f32.gmra.mxu0 %v107
    %v212 = vpop.f32.mrf.mxu0
    %v213 = vadd.f32 %v80, %v212
    %v214 = vpop.f32.mrf.mxu0
    %215 = vmatprep.mubr.f32.mxu0 0.0
    %216 = vmatmul.mubr.f32.gmra.mxu0 %v110
    %v217 = vpop.f32.mrf.mxu0
    %v218 = vadd.f32 %v85, %v217
    %v219 = vpop.f32.mrf.mxu0
    %220 = vdwg.mxu0
    %v221 = vmax.f32 %v183, 0.0
    %v222 = vmax.f32 %v188, 0.0
    %v223 = vmax.f32 %v193, 0.0
    %v224 = vmax.f32 %v198, 0.0
    %v225 = vmax.f32 %v203, 0.0
    %v226 = vmax.f32 %v208, 0.0
    %v227 = vmax.f32 %v213, 0.0
    %v228 = vmax.f32 %v218, 0.0
    %v229 = vld [vmem:[%s3] sm:$0xff]
    %v230 = vld [vmem:[%s3 + $0x8] sm:$0xff]
    %v231 = vld [vmem:[%s3 + $0x10] sm:$0xff]
    %v232 = vld [vmem:[%s3 + $0x18] sm:$0xff]
    %v233 = vld [vmem:[%s3 + $0x20] sm:$0xff]
    %v234 = vld [vmem:[%s3 + $0x28] sm:$0xff]
    %v235 = vld [vmem:[%s3 + $0x30] sm:$0xff]
    %v236 = vld [vmem:[%s3 + $0x38] sm:$0xff]
    %v237 = vld [vmem:[%s4] sm:$0xff]
    %v238 = vld [vmem:[%s4 + $0x8] sm:$0xff]
    %v239 = vld [vmem:[%s4 + $0x10] sm:$0xff]
    %v240 = vld [vmem:[%s4 + $0x18] sm:$0xff]
    %v241 = vld [vmem:[%s4 + $0x20] sm:$0xff]
    %v242 = vld [vmem:[%s4 + $0x28] sm:$0xff]
    %v243 = vld [vmem:[%s4 + $0x30] sm:$0xff]
    %v244 = vld [vmem:[%s4 + $0x38] sm:$0xff]
    %246 = vset.pattern.permute.xlu0 0
    %247 = vperm.xlu0 %246, %v237
    %v248 = vpop.permute.xlu0 %247
    %251 = vset.pattern.permute.xlu0 0
    %252 = vperm.xlu0 %251, %v238
    %v253 = vpop.permute.xlu0 %252
    %256 = vset.pattern.permute.xlu0 0
    %257 = vperm.xlu0 %256, %v239
    %v258 = vpop.permute.xlu0 %257
    %261 = vset.pattern.permute.xlu0 0
    %262 = vperm.xlu0 %261, %v240
    %v263 = vpop.permute.xlu0 %262
    %266 = vset.pattern.permute.xlu0 0
    %267 = vperm.xlu0 %266, %v241
    %v268 = vpop.permute.xlu0 %267
    %271 = vset.pattern.permute.xlu0 0
    %272 = vperm.xlu0 %271, %v242
    %v273 = vpop.permute.xlu0 %272
    %276 = vset.pattern.permute.xlu0 0
    %277 = vperm.xlu0 %276, %v243
    %v278 = vpop.permute.xlu0 %277
    %281 = vset.pattern.permute.xlu0 0
    %282 = vperm.xlu0 %281, %v244
    %v283 = vpop.permute.xlu0 %282
    %vm285 = vcmask 523264
    %v287 = vsel %vm285, %v229, 0
    %v290 = vsel %vm285, %v230, 0
    %v293 = vsel %vm285, %v231, 0
    %v296 = vsel %vm285, %v232, 0
    %v299 = vsel %vm285, %v233, 0
    %v302 = vsel %vm285, %v234, 0
    %v305 = vsel %vm285, %v235, 0
    %v308 = vsel %vm285, %v236, 0
    %310 = vmatprep.subr.mxu0 0.0
    %311 = vmatpush1.msra.mxu0 0.0
    %312 = vmatprep.subr.mxu0 0.0
    %313 = vmatpush1.msra.mxu0 0.0
    %314 = vmatprep.subr.mxu0 0.0
    %315 = vmatpush1.msra.mxu0 0.0
    %316 = vmatprep.subr.mxu0 0.0
    %317 = vmatpush1.msra.mxu0 0.0
    %318 = vmatprep.subr.mxu0 0.0
    %319 = vmatpush1.msra.mxu0 0.0
    %320 = vmatprep.subr.mxu0 0.0
    %321 = vmatpush1.msra.mxu0 0.0
    %322 = vmatprep.subr.mxu0 0.0
    %323 = vmatpush1.msra.mxu0 0.0
    %324 = vmatprep.subr.mxu0 0.0
    %325 = vmatpush1.msra.mxu0 0.0
    %326 = vmatprep.subr.mxu0 0.0
    %327 = vmatpush1.msra.mxu0 %v228
    %328 = vmatprep.subr.mxu0 0.0
    %329 = vmatpush1.msra.mxu0 %v227
    %330 = vmatprep.subr.mxu0 0.0
    %331 = vmatpush1.msra.mxu0 %v226
    %332 = vmatprep.subr.mxu0 0.0
    %333 = vmatpush1.msra.mxu0 %v225
    %334 = vmatprep.subr.mxu0 0.0
    %335 = vmatpush1.msra.mxu0 %v224
    %336 = vmatprep.subr.mxu0 0.0
    %337 = vmatpush1.msra.mxu0 %v223
    %338 = vmatprep.subr.mxu0 0.0
    %339 = vmatpush1.msra.mxu0 %v222
    %340 = vmatprep.subr.mxu0 0.0
    %341 = vmatpush1.msra.mxu0 %v221
    %342 = vmatprep.subr.mxu0 0.0
    %343 = vmatpush2.msra.mxu0 0.0
    %344 = vmatprep.subr.mxu0 0.0
    %345 = vmatpush2.msra.mxu0 0.0
    %346 = vmatprep.subr.mxu0 0.0
    %347 = vmatpush2.msra.mxu0 0.0
    %348 = vmatprep.subr.mxu0 0.0
    %349 = vmatpush2.msra.mxu0 0.0
    %350 = vmatprep.subr.mxu0 0.0
    %351 = vmatpush2.msra.mxu0 0.0
    %352 = vmatprep.subr.mxu0 0.0
    %353 = vmatpush2.msra.mxu0 0.0
    %354 = vmatprep.subr.mxu0 0.0
    %355 = vmatpush2.msra.mxu0 0.0
    %356 = vmatprep.subr.mxu0 0.0
    %357 = vmatpush2.msra.mxu0 0.0
    %358 = vmatprep.subr.mxu0 0.0
    %359 = vmatpush2.msra.mxu0 0.0
    %360 = vmatprep.subr.mxu0 0.0
    %361 = vmatpush2.msra.mxu0 0.0
    %362 = vmatprep.subr.mxu0 0.0
    %363 = vmatpush2.msra.mxu0 0.0
    %364 = vmatprep.subr.mxu0 0.0
    %365 = vmatpush2.msra.mxu0 0.0
    %366 = vmatprep.subr.mxu0 0.0
    %367 = vmatpush2.msra.mxu0 0.0
    %368 = vmatprep.subr.mxu0 0.0
    %369 = vmatpush2.msra.mxu0 0.0
    %370 = vmatprep.subr.mxu0 0.0
    %371 = vmatpush2.msra.mxu0 0.0
    %372 = vmatprep.subr.mxu0 0.0
    %373 = vmatpush2.msra.mxu0 0.0
    %374 = vmatprep.mubr.f32.mxu0 0.0
    %375 = vmatmul.mubr.f32.gmra.mxu0 %v287
    %v376 = vpop.f32.mrf.mxu0
    %v377 = vadd.f32 %v248, %v376
    %v378 = vpop.f32.mrf.mxu0
    %379 = vmatprep.mubr.f32.mxu0 0.0
    %380 = vmatmul.mubr.f32.gmra.mxu0 %v290
    %v381 = vpop.f32.mrf.mxu0
    %v382 = vadd.f32 %v253, %v381
    %v383 = vpop.f32.mrf.mxu0
    %384 = vmatprep.mubr.f32.mxu0 0.0
    %385 = vmatmul.mubr.f32.gmra.mxu0 %v293
    %v386 = vpop.f32.mrf.mxu0
    %v387 = vadd.f32 %v258, %v386
    %v388 = vpop.f32.mrf.mxu0
    %389 = vmatprep.mubr.f32.mxu0 0.0
    %390 = vmatmul.mubr.f32.gmra.mxu0 %v296
    %v391 = vpop.f32.mrf.mxu0
    %v392 = vadd.f32 %v263, %v391
    %v393 = vpop.f32.mrf.mxu0
    %394 = vmatprep.mubr.f32.mxu0 0.0
    %395 = vmatmul.mubr.f32.gmra.mxu0 %v299
    %v396 = vpop.f32.mrf.mxu0
    %v397 = vadd.f32 %v268, %v396
    %v398 = vpop.f32.mrf.mxu0
    %399 = vmatprep.mubr.f32.mxu0 0.0
    %400 = vmatmul.mubr.f32.gmra.mxu0 %v302
    %v401 = vpop.f32.mrf.mxu0
    %v402 = vadd.f32 %v273, %v401
    %v403 = vpop.f32.mrf.mxu0
    %404 = vmatprep.mubr.f32.mxu0 0.0
    %405 = vmatmul.mubr.f32.gmra.mxu0 %v305
    %v406 = vpop.f32.mrf.mxu0
    %v407 = vadd.f32 %v278, %v406
    %v408 = vpop.f32.mrf.mxu0
    %409 = vmatprep.mubr.f32.mxu0 0.0
    %410 = vmatmul.mubr.f32.gmra.mxu0 %v308
    %v411 = vpop.f32.mrf.mxu0
    %v412 = vadd.f32 %v283, %v411
    %v413 = vpop.f32.mrf.mxu0
    %414 = vdwg.mxu0
    %v415 = vmax.f32 %v377, 0.0
    %v416 = vmax.f32 %v382, 0.0
    %v417 = vmax.f32 %v387, 0.0
    %v418 = vmax.f32 %v392, 0.0
    %v419 = vmax.f32 %v397, 0.0
    %v420 = vmax.f32 %v402, 0.0
    %v421 = vmax.f32 %v407, 0.0
    %v422 = vmax.f32 %v412, 0.0
    %v423 = vld [vmem:[%s5] sm:$0xff]
    %v424 = vld [vmem:[%s5 + $0x8] sm:$0xff]
    %v425 = vld [vmem:[%s5 + $0x10] sm:$0xff]
    %v426 = vld [vmem:[%s5 + $0x18] sm:$0xff]
    %v427 = vld [vmem:[%s5 + $0x20] sm:$0xff]
    %v428 = vld [vmem:[%s5 + $0x28] sm:$0xff]
    %v429 = vld [vmem:[%s5 + $0x30] sm:$0xff]
    %v430 = vld [vmem:[%s5 + $0x38] sm:$0xff]
    %432 = vset.pattern.permute.xlu0 0
    %433 = vperm.xlu0 %432, %v423
    %v434 = vpop.permute.xlu0 %433
    %437 = vset.pattern.permute.xlu0 0
    %438 = vperm.xlu0 %437, %v424
    %v439 = vpop.permute.xlu0 %438
    %442 = vset.pattern.permute.xlu0 0
    %443 = vperm.xlu0 %442, %v425
    %v444 = vpop.permute.xlu0 %443
    %447 = vset.pattern.permute.xlu0 0
    %448 = vperm.xlu0 %447, %v426
    %v449 = vpop.permute.xlu0 %448
    %452 = vset.pattern.permute.xlu0 0
    %453 = vperm.xlu0 %452, %v427
    %v454 = vpop.permute.xlu0 %453
    %457 = vset.pattern.permute.xlu0 0
    %458 = vperm.xlu0 %457, %v428
    %v459 = vpop.permute.xlu0 %458
    %462 = vset.pattern.permute.xlu0 0
    %463 = vperm.xlu0 %462, %v429
    %v464 = vpop.permute.xlu0 %463
    %467 = vset.pattern.permute.xlu0 0
    %468 = vperm.xlu0 %467, %v430
    %v469 = vpop.permute.xlu0 %468
    %v471 = vmul.f32 %v415, %v434
    %v472 = vmul.f32 %v416, %v439
    %v473 = vmul.f32 %v417, %v444
    %v474 = vmul.f32 %v418, %v449
    %v475 = vmul.f32 %v419, %v454
    %v476 = vmul.f32 %v420, %v459
    %v477 = vmul.f32 %v421, %v464
    %v478 = vmul.f32 %v422, %v469
    %vm479 = vcmask 64512
    %v480 = vsel %vm479, %v471, 0.0
    %v481 = vsel %vm479, %v472, 0.0
    %v482 = vadd.f32 %v480, %v481
    %v483 = vsel %vm479, %v473, 0.0
    %v484 = vadd.f32 %v482, %v483
    %v485 = vsel %vm479, %v474, 0.0
    %v486 = vadd.f32 %v484, %v485
    %v487 = vsel %vm479, %v475, 0.0
    %v488 = vadd.f32 %v486, %v487
    %v489 = vsel %vm479, %v476, 0.0
    %v490 = vadd.f32 %v488, %v489
    %v491 = vsel %vm479, %v477, 0.0
    %v492 = vadd.f32 %v490, %v491
    %v493 = vsel %vm479, %v478, 0.0
    %v494 = vadd.f32 %v492, %v493
    %v495 = vrot.slane %v494, 4
    %v496 = vadd.f32 %v494, %v495
    %v497 = vrot.slane %v496, 2
    %v498 = vadd.f32 %v496, %v497
    %v499 = vrot.slane %v498, 1
    %v500 = vadd.f32 %v498, %v499
    %s501 = sld [smem:[#allocation2]]
    %v502 = vstv %s501
    %v503 = vadd.f32 %v500, %v502
    %vm504 = vcmask 57344
    %505 = vst.msk [vmem:[#allocation3] sm:$0x1] %vm504, %v503
    // Predicated region
    $region30: #{tpu_custom_call.1} parent=1 // pred_check
      _
    $region31: #{tpu_custom_call.1} parent=1 // pred_check_branch
      %507 = sbr.rel (0) target = $region33
    $region32: #{tpu_custom_call.1} parent=1 // pred_region
      %s509 = ssub.s32 16, 16
      %510 = vsyncadd [#allocation4], %s509
      %s512 = sshll.u32 [#allocation3], 4
      %s513 = int_to_ptr.vmem [resolvable:$true] %s512
      %515 = dma.vmem_to_hbm [thread:$0]  %s513, 16, %s7, [#allocation4]
    $region33: #{tpu_custom_call.1} parent=1 // pred_fallthru
      _
    // Predicated region
    $region34: #{tpu_custom_call.1} parent=1 // pred_check
      _
    $region35: #{tpu_custom_call.1} parent=1 // pred_check_branch
      %517 = sbr.rel (0) target = $region37
    $region36: #{tpu_custom_call.1} parent=1 // pred_region
      %518 = dma.done [#allocation4], 16
    $region37: #{tpu_custom_call.1} parent=1 // pred_fallthru
      _
    %519 = vsyncpa [#allocation4], 1

</llo_original>
